<compile_context>
chip_gen: v6e
topology: v6e:2x2x1
jax: 0.10.0
libtpu: 0.0.40
codegen_flags: <defaults>
</compile_context>

<pallas_src>
import math
from functools import partial

import jax
import jax.numpy as jnp
from jax.experimental import pallas as pl
from jax.experimental.pallas import tpu as pltpu


def _round_up(v, m):
    return ((v + m - 1) // m) * m


def _fused_value_kernel(static_dims, x_ref, w1_ref, b1_ref, w2_ref, b2_ref,
                        o_ref, a1_ref, a2_ref):
    """conv1 -> conv2 -> conv2 for ONE batch element, fully VMEM resident.

    Activations are (H, lanes) slabs with lanes = pad128(W*C); weights are
    per-ky banded matrices of shape (k, lanes, lanes); biases are (1, lanes).
    """
    k, h1, h2, h3 = static_dims

    def conv_layer(src_ref, dst_ref, w_ref, b_ref, ho):
        lanes = dst_ref.shape[-1]
        # Bias folded into the accumulator initialization.
        acc = jnp.broadcast_to(b_ref[...], (ho, lanes)).astype(jnp.float32)
        for ky in range(k):                          # k is tiny -> unrolled
            # Full-row, lane-aligned LHS slab; kx is folded into the banded RHS.
            acc = acc + jnp.dot(src_ref[ky:ky + ho, :], w_ref[ky],
                                preferred_element_type=jnp.float32)
        dst_ref[...] = acc.astype(dst_ref.dtype)

    conv_layer(x_ref, a1_ref, w1_ref, b1_ref, h1)    # conv1
    conv_layer(a1_ref, a2_ref, w2_ref, b2_ref, h2)   # conv2 (first pass)
    conv_layer(a2_ref, o_ref, w2_ref, b2_ref, h3)    # conv2 (second pass, same packed weights)


def _band_pack_conv(w, b, w_in, w_out, lanes):
    """Pack torch-style OIHW conv weights into per-ky banded GEMM matrices.

    band[ky, w_i*Cin + ci, w_o*Cout + co] = w[co, ci, ky, w_i - w_o]
        when 0 <= w_i - w_o < k, else 0;  zero-padded to (lanes, lanes).
    brow[0, w_o*Cout + co] = b[co];       zero-padded to (1, lanes).
    """
    cout, cin, k, _ = w.shape
    assert w_in * cin <= lanes and w_out * cout <= lanes
    wt = jnp.transpose(w, (2, 3, 1, 0))                     # (ky, kx, cin, cout)
    diff = jnp.arange(w_in)[:, None] - jnp.arange(w_out)[None, :]
    valid = ((diff >= 0) & (diff < k)).astype(w.dtype)      # (w_in, w_out)
    band = wt[:, jnp.clip(diff, 0, k - 1)]                  # (k, w_in, w_out, cin, cout)
    band = band * valid[None, :, :, None, None]
    band = jnp.transpose(band, (0, 1, 3, 2, 4))             # (k, w_in, cin, w_out, cout)
    band = band.reshape(k, w_in * cin, w_out * cout)
    band = jnp.pad(band, ((0, 0),
                          (0, lanes - w_in * cin),
                          (0, lanes - w_out * cout)))
    brow = jnp.pad(jnp.tile(b, (w_out,)), (0, lanes - w_out * cout))
    return band, brow.reshape(1, lanes)


def make_value_forward(params, x_shape):
    """Builds a jitted forward(x) for a fixed NCHW input shape (N, Cin, H, W)."""
    N, Cin, H, W = x_shape
    w1, b1 = params["conv1"]
    w2, b2 = params["conv2"]
    k = w1.shape[-1]
    C = w1.shape[0]                        # hidd_channel
    assert w1.shape[1] == Cin and w2.shape[1] == C

    H1, W1 = H - k + 1, W - k + 1          # after conv1
    H2, W2 = H1 - k + 1, W1 - k + 1        # after conv2 (first pass)
    H3, W3 = H2 - k + 1, W2 - k + 1        # after conv2 (second pass)

    # One lane width for every activation slab, zero-padded to a 128 multiple.
    lanes = _round_up(max(W * Cin, W1 * C, W2 * C, W3 * C), 128)

    # One-time host-side packing (becomes jit constants).  conv2 is packed
    # ONCE for its wider first application; the banded matrix is shift-
    # invariant, so the same packing drives the narrower second application.
    w1e, b1e = _band_pack_conv(w1, b1, W, W1, lanes)
    w2e, b2e = _band_pack_conv(w2, b2, W1, W2, lanes)

    kernel = partial(_fused_value_kernel, (k, H1, H2, H3))

    fused = pl.pallas_call(
        kernel,
        out_shape=jax.ShapeDtypeStruct((N, H3, lanes), jnp.float32),
        grid=(N,),
        in_specs=[
            pl.BlockSpec((None, H, lanes), lambda n: (n, 0, 0)),    # x slab (per batch)
            pl.BlockSpec((k, lanes, lanes), lambda n: (0, 0, 0)),   # conv1 banded W (resident)
            pl.BlockSpec((1, lanes), lambda n: (0, 0)),             # conv1 bias row
            pl.BlockSpec((k, lanes, lanes), lambda n: (0, 0, 0)),   # conv2 banded W (resident)
            pl.BlockSpec((1, lanes), lambda n: (0, 0)),             # conv2 bias row
        ],
        out_specs=pl.BlockSpec((None, H3, lanes), lambda n: (n, 0, 0)),
        scratch_shapes=[
            pltpu.VMEM((H1, lanes), jnp.float32),   # conv1 output
            pltpu.VMEM((H2, lanes), jnp.float32),   # conv2 (1st pass) output
        ],
        compiler_params=pltpu.CompilerParams(
            dimension_semantics=("parallel",)),     # batch split across TCs on v7x
    )

    @jax.jit
    def forward(x):
        # Boundary-only layout conversion: NCHW -> zero-padded (N, H, lanes).
        # TODO(synk): accept NHWC / slab input directly to drop these boundary
        # transposes if the caller can tolerate a different interface.
        xs = jnp.transpose(x, (0, 2, 3, 1)).reshape(N, H, W * Cin)
        xs = jnp.pad(xs, ((0, 0), (0, 0), (0, lanes - W * Cin)))
        out = fused(xs, w1e, b1e, w2e, b2e)
        out = out[:, :, :W3 * C].reshape(N, H3, W3, C)
        return jnp.transpose(out, (0, 3, 1, 2))     # back to NCHW

    return forward


def init_value_params(key, in_channel, hidd_channel, k):
    # Deterministic init mimicking torch.nn.Conv2d default:
    # U(-1/sqrt(fan_in), 1/sqrt(fan_in)) for weight and bias.
    def conv_init(ck, cout, cin, ks):
        kw, kb = jax.random.split(ck)
        bound = 1.0 / math.sqrt(cin * ks * ks)
        w = jax.random.uniform(kw, (cout, cin, ks, ks), jnp.float32, -bound, bound)
        b = jax.random.uniform(kb, (cout,), jnp.float32, -bound, bound)
        return w, b

    k1, k2, k3 = jax.random.split(key, 3)
    params = {
        "conv1": conv_init(k1, hidd_channel, in_channel, k),
        "conv2": conv_init(k2, hidd_channel, hidd_channel, k),
        "conv3": conv_init(k3, hidd_channel, hidd_channel, k),  # unused in forward
    }
    # TODO(synk): l1 = Linear(lin_dim, 4), Adam optimizer, loss(), optimize()
    # are never used by forward(); not translated to the kernel path.
    return params


def _conv_ref(x, w, b):
    out = jax.lax.conv_general_dilated(
        x, w, window_strides=(1, 1), padding="VALID",
        dimension_numbers=("NCHW", "OIHW", "NCHW"),
        precision=jax.lax.Precision.HIGHEST)
    return out + b.reshape(1, -1, 1, 1)


if __name__ == "__main__":
    in_channel, hidd_channel, kernal_sz = 4, 8, 3
    key = jax.random.PRNGKey(0)
    kp, kx = jax.random.split(key)
    params = init_value_params(kp, in_channel, hidd_channel, kernal_sz)

    x = jax.random.normal(kx, (2, in_channel, 16, 16), jnp.float32)  # NCHW

    forward = make_value_forward(params, x.shape)
    out = jax.block_until_ready(forward(x))

    # pure-JAX reference for correctness: conv1 -> conv2 -> conv2
    ref = _conv_ref(x, *params["conv1"])
    ref = _conv_ref(ref, *params["conv2"])
    ref = _conv_ref(ref, *params["conv2"])

    assert out.shape == (2, hidd_channel, 10, 10), out.shape
    max_err = float(jnp.max(jnp.abs(out - ref)))
    assert jnp.allclose(out, ref, atol=5e-4, rtol=5e-4), max_err
    print("KERNEL_OK")
</pallas_src>

<mosaic_0001>
module attributes {stable_mosaic.version = 11 : i64} {
  func.func @_fused_value_kernel(%arg0: i32, %arg1: memref<1x16x128xf32, #tpu.memory_space<vmem>>, %arg2: memref<3x128x128xf32, #tpu.memory_space<vmem>>, %arg3: memref<1x128xf32, #tpu.memory_space<vmem>>, %arg4: memref<3x128x128xf32, #tpu.memory_space<vmem>>, %arg5: memref<1x128xf32, #tpu.memory_space<vmem>>, %arg6: memref<1x10x128xf32, #tpu.memory_space<vmem>>, %arg7: memref<14x128xf32, #tpu.memory_space<vmem>>, %arg8: memref<12x128xf32, #tpu.memory_space<vmem>>) attributes {dimension_semantics = [#tpu.dimension_semantics<parallel>], iteration_bounds = array<i64: 2>, scalar_prefetch = 0 : i64, scratch_operands = 2 : i64, tpu.core_type = #tpu.core_type<tc>, window_params = [{transform_indices = @transform_0, window_bounds = array<i64: 1, 16, 128>}, {pipeline_mode = #tpu.pipeline_mode<synchronous>, transform_indices = @transform_1, window_bounds = array<i64: 3, 128, 128>}, {pipeline_mode = #tpu.pipeline_mode<synchronous>, transform_indices = @transform_2, window_bounds = array<i64: 1, 128>}, {pipeline_mode = #tpu.pipeline_mode<synchronous>, transform_indices = @transform_3, window_bounds = array<i64: 3, 128, 128>}, {pipeline_mode = #tpu.pipeline_mode<synchronous>, transform_indices = @transform_4, window_bounds = array<i64: 1, 128>}, {transform_indices = @transform_5, window_bounds = array<i64: 1, 10, 128>}]} {
    %c0 = arith.constant 0 : index
    %c0_0 = arith.constant 0 : index
    %0 = vector.load %arg3[%c0, %c0_0] : memref<1x128xf32, #tpu.memory_space<vmem>>, vector<1x128xf32>
    %1 = vector.shape_cast %0 : vector<1x128xf32> to vector<1x128xf32>
    %2 = vector.broadcast %1 : vector<1x128xf32> to vector<14x128xf32>
    %c0_1 = arith.constant 0 : index
    %c0_2 = arith.constant 0 : index
    %c0_3 = arith.constant 0 : index
    %3 = vector.load %arg1[%c0_1, %c0_2, %c0_3] : memref<1x16x128xf32, #tpu.memory_space<vmem>>, vector<1x14x128xf32>
    %4 = vector.shape_cast %3 : vector<1x14x128xf32> to vector<14x128xf32>
    %c0_4 = arith.constant 0 : index
    %c0_5 = arith.constant 0 : index
    %c0_6 = arith.constant 0 : index
    %5 = vector.load %arg2[%c0_4, %c0_5, %c0_6] : memref<3x128x128xf32, #tpu.memory_space<vmem>>, vector<1x128x128xf32>
    %6 = vector.shape_cast %5 : vector<1x128x128xf32> to vector<128x128xf32>
    %cst = arith.constant dense<0.000000e+00> : vector<14x128xf32>
    %7 = tpu.matmul %4, %6, %cst {dimension_numbers = #tpu.dot_dimension_numbers<[1], [0], [0], [1], [0, 0, 1, 1], [], []>} : vector<14x128xf32>, vector<128x128xf32>, vector<14x128xf32> -> vector<14x128xf32>
    %8 = arith.addf %2, %7 : vector<14x128xf32>
    %c0_7 = arith.constant 0 : index
    %c1 = arith.constant 1 : index
    %c0_8 = arith.constant 0 : index
    %9 = vector.load %arg1[%c0_7, %c1, %c0_8] : memref<1x16x128xf32, #tpu.memory_space<vmem>>, vector<1x14x128xf32>
    %10 = vector.shape_cast %9 : vector<1x14x128xf32> to vector<14x128xf32>
    %c1_9 = arith.constant 1 : index
    %c0_10 = arith.constant 0 : index
    %c0_11 = arith.constant 0 : index
    %11 = vector.load %arg2[%c1_9, %c0_10, %c0_11] : memref<3x128x128xf32, #tpu.memory_space<vmem>>, vector<1x128x128xf32>
    %12 = vector.shape_cast %11 : vector<1x128x128xf32> to vector<128x128xf32>
    %cst_12 = arith.constant dense<0.000000e+00> : vector<14x128xf32>
    %13 = tpu.matmul %10, %12, %cst_12 {dimension_numbers = #tpu.dot_dimension_numbers<[1], [0], [0], [1], [0, 0, 1, 1], [], []>} : vector<14x128xf32>, vector<128x128xf32>, vector<14x128xf32> -> vector<14x128xf32>
    %14 = arith.addf %8, %13 : vector<14x128xf32>
    %c0_13 = arith.constant 0 : index
    %c2 = arith.constant 2 : index
    %c0_14 = arith.constant 0 : index
    %15 = vector.load %arg1[%c0_13, %c2, %c0_14] : memref<1x16x128xf32, #tpu.memory_space<vmem>>, vector<1x14x128xf32>
    %16 = vector.shape_cast %15 : vector<1x14x128xf32> to vector<14x128xf32>
    %c2_15 = arith.constant 2 : index
    %c0_16 = arith.constant 0 : index
    %c0_17 = arith.constant 0 : index
    %17 = vector.load %arg2[%c2_15, %c0_16, %c0_17] : memref<3x128x128xf32, #tpu.memory_space<vmem>>, vector<1x128x128xf32>
    %18 = vector.shape_cast %17 : vector<1x128x128xf32> to vector<128x128xf32>
    %cst_18 = arith.constant dense<0.000000e+00> : vector<14x128xf32>
    %19 = tpu.matmul %16, %18, %cst_18 {dimension_numbers = #tpu.dot_dimension_numbers<[1], [0], [0], [1], [0, 0, 1, 1], [], []>} : vector<14x128xf32>, vector<128x128xf32>, vector<14x128xf32> -> vector<14x128xf32>
    %20 = arith.addf %14, %19 : vector<14x128xf32>
    %c0_19 = arith.constant 0 : index
    %c0_20 = arith.constant 0 : index
    %21 = vector.load %arg7[%c0_19, %c0_20] : memref<14x128xf32, #tpu.memory_space<vmem>>, vector<14x128xf32>
    tpu.vector_store %arg7[%c0_19, %c0_20], %20 {strides = array<i32>} : memref<14x128xf32, #tpu.memory_space<vmem>>, vector<14x128xf32>,
    %c0_21 = arith.constant 0 : index
    %c0_22 = arith.constant 0 : index
    %22 = vector.load %arg5[%c0_21, %c0_22] : memref<1x128xf32, #tpu.memory_space<vmem>>, vector<1x128xf32>
    %23 = vector.shape_cast %22 : vector<1x128xf32> to vector<1x128xf32>
    %24 = vector.broadcast %23 : vector<1x128xf32> to vector<12x128xf32>
    %c0_23 = arith.constant 0 : index
    %c0_24 = arith.constant 0 : index
    %25 = vector.load %arg7[%c0_23, %c0_24] : memref<14x128xf32, #tpu.memory_space<vmem>>, vector<12x128xf32>
    %c0_25 = arith.constant 0 : index
    %c0_26 = arith.constant 0 : index
    %c0_27 = arith.constant 0 : index
    %26 = vector.load %arg4[%c0_25, %c0_26, %c0_27] : memref<3x128x128xf32, #tpu.memory_space<vmem>>, vector<1x128x128xf32>
    %27 = vector.shape_cast %26 : vector<1x128x128xf32> to vector<128x128xf32>
    %cst_28 = arith.constant dense<0.000000e+00> : vector<12x128xf32>
    %28 = tpu.matmul %25, %27, %cst_28 {dimension_numbers = #tpu.dot_dimension_numbers<[1], [0], [0], [1], [0, 0, 1, 1], [], []>} : vector<12x128xf32>, vector<128x128xf32>, vector<12x128xf32> -> vector<12x128xf32>
    %29 = arith.addf %24, %28 : vector<12x128xf32>
    %c1_29 = arith.constant 1 : index
    %c0_30 = arith.constant 0 : index
    %30 = vector.load %arg7[%c1_29, %c0_30] : memref<14x128xf32, #tpu.memory_space<vmem>>, vector<12x128xf32>
    %c1_31 = arith.constant 1 : index
    %c0_32 = arith.constant 0 : index
    %c0_33 = arith.constant 0 : index
    %31 = vector.load %arg4[%c1_31, %c0_32, %c0_33] : memref<3x128x128xf32, #tpu.memory_space<vmem>>, vector<1x128x128xf32>
    %32 = vector.shape_cast %31 : vector<1x128x128xf32> to vector<128x128xf32>
    %cst_34 = arith.constant dense<0.000000e+00> : vector<12x128xf32>
    %33 = tpu.matmul %30, %32, %cst_34 {dimension_numbers = #tpu.dot_dimension_numbers<[1], [0], [0], [1], [0, 0, 1, 1], [], []>} : vector<12x128xf32>, vector<128x128xf32>, vector<12x128xf32> -> vector<12x128xf32>
    %34 = arith.addf %29, %33 : vector<12x128xf32>
    %c2_35 = arith.constant 2 : index
    %c0_36 = arith.constant 0 : index
    %35 = vector.load %arg7[%c2_35, %c0_36] : memref<14x128xf32, #tpu.memory_space<vmem>>, vector<12x128xf32>
    %c2_37 = arith.constant 2 : index
    %c0_38 = arith.constant 0 : index
    %c0_39 = arith.constant 0 : index
    %36 = vector.load %arg4[%c2_37, %c0_38, %c0_39] : memref<3x128x128xf32, #tpu.memory_space<vmem>>, vector<1x128x128xf32>
    %37 = vector.shape_cast %36 : vector<1x128x128xf32> to vector<128x128xf32>
    %cst_40 = arith.constant dense<0.000000e+00> : vector<12x128xf32>
    %38 = tpu.matmul %35, %37, %cst_40 {dimension_numbers = #tpu.dot_dimension_numbers<[1], [0], [0], [1], [0, 0, 1, 1], [], []>} : vector<12x128xf32>, vector<128x128xf32>, vector<12x128xf32> -> vector<12x128xf32>
    %39 = arith.addf %34, %38 : vector<12x128xf32>
    %c0_41 = arith.constant 0 : index
    %c0_42 = arith.constant 0 : index
    %40 = vector.load %arg8[%c0_41, %c0_42] : memref<12x128xf32, #tpu.memory_space<vmem>>, vector<12x128xf32>
    tpu.vector_store %arg8[%c0_41, %c0_42], %39 {strides = array<i32>} : memref<12x128xf32, #tpu.memory_space<vmem>>, vector<12x128xf32>,
    %c0_43 = arith.constant 0 : index
    %c0_44 = arith.constant 0 : index
    %41 = vector.load %arg5[%c0_43, %c0_44] : memref<1x128xf32, #tpu.memory_space<vmem>>, vector<1x128xf32>
    %42 = vector.shape_cast %41 : vector<1x128xf32> to vector<1x128xf32>
    %43 = vector.broadcast %42 : vector<1x128xf32> to vector<10x128xf32>
    %c0_45 = arith.constant 0 : index
    %c0_46 = arith.constant 0 : index
    %44 = vector.load %arg8[%c0_45, %c0_46] : memref<12x128xf32, #tpu.memory_space<vmem>>, vector<10x128xf32>
    %c0_47 = arith.constant 0 : index
    %c0_48 = arith.constant 0 : index
    %c0_49 = arith.constant 0 : index
    %45 = vector.load %arg4[%c0_47, %c0_48, %c0_49] : memref<3x128x128xf32, #tpu.memory_space<vmem>>, vector<1x128x128xf32>
    %46 = vector.shape_cast %45 : vector<1x128x128xf32> to vector<128x128xf32>
    %cst_50 = arith.constant dense<0.000000e+00> : vector<10x128xf32>
    %47 = tpu.matmul %44, %46, %cst_50 {dimension_numbers = #tpu.dot_dimension_numbers<[1], [0], [0], [1], [0, 0, 1, 1], [], []>} : vector<10x128xf32>, vector<128x128xf32>, vector<10x128xf32> -> vector<10x128xf32>
    %48 = arith.addf %43, %47 : vector<10x128xf32>
    %c1_51 = arith.constant 1 : index
    %c0_52 = arith.constant 0 : index
    %49 = vector.load %arg8[%c1_51, %c0_52] : memref<12x128xf32, #tpu.memory_space<vmem>>, vector<10x128xf32>
    %c1_53 = arith.constant 1 : index
    %c0_54 = arith.constant 0 : index
    %c0_55 = arith.constant 0 : index
    %50 = vector.load %arg4[%c1_53, %c0_54, %c0_55] : memref<3x128x128xf32, #tpu.memory_space<vmem>>, vector<1x128x128xf32>
    %51 = vector.shape_cast %50 : vector<1x128x128xf32> to vector<128x128xf32>
    %cst_56 = arith.constant dense<0.000000e+00> : vector<10x128xf32>
    %52 = tpu.matmul %49, %51, %cst_56 {dimension_numbers = #tpu.dot_dimension_numbers<[1], [0], [0], [1], [0, 0, 1, 1], [], []>} : vector<10x128xf32>, vector<128x128xf32>, vector<10x128xf32> -> vector<10x128xf32>
    %53 = arith.addf %48, %52 : vector<10x128xf32>
    %c2_57 = arith.constant 2 : index
    %c0_58 = arith.constant 0 : index
    %54 = vector.load %arg8[%c2_57, %c0_58] : memref<12x128xf32, #tpu.memory_space<vmem>>, vector<10x128xf32>
    %c2_59 = arith.constant 2 : index
    %c0_60 = arith.constant 0 : index
    %c0_61 = arith.constant 0 : index
    %55 = vector.load %arg4[%c2_59, %c0_60, %c0_61] : memref<3x128x128xf32, #tpu.memory_space<vmem>>, vector<1x128x128xf32>
    %56 = vector.shape_cast %55 : vector<1x128x128xf32> to vector<128x128xf32>
    %cst_62 = arith.constant dense<0.000000e+00> : vector<10x128xf32>
    %57 = tpu.matmul %54, %56, %cst_62 {dimension_numbers = #tpu.dot_dimension_numbers<[1], [0], [0], [1], [0, 0, 1, 1], [], []>} : vector<10x128xf32>, vector<128x128xf32>, vector<10x128xf32> -> vector<10x128xf32>
    %58 = arith.addf %53, %57 : vector<10x128xf32>
    %c0_63 = arith.constant 0 : index
    %c0_64 = arith.constant 0 : index
    %c0_65 = arith.constant 0 : index
    %59 = vector.load %arg6[%c0_63, %c0_64, %c0_65] : memref<1x10x128xf32, #tpu.memory_space<vmem>>, vector<1x10x128xf32>
    %60 = vector.shape_cast %59 : vector<1x10x128xf32> to vector<10x128xf32>
    %61 = vector.shape_cast %58 : vector<10x128xf32> to vector<1x10x128xf32>
    tpu.vector_store %arg6[%c0_63, %c0_64, %c0_65], %61 {strides = array<i32>} : memref<1x10x128xf32, #tpu.memory_space<vmem>>, vector<1x10x128xf32>,
    return
  }
  func.func @transform_0(%arg0: i32) -> (i32, i32, i32) {
    %c0_i32 = arith.constant 0 : i32
    %c0_i32_0 = arith.constant 0 : i32
    %c0_i32_1 = arith.constant 0 : i32
    return %arg0, %c0_i32, %c0_i32_0 : i32, i32, i32
  }
  func.func @transform_1(%arg0: i32) -> (i32, i32, i32) {
    %c0_i32 = arith.constant 0 : i32
    %c0_i32_0 = arith.constant 0 : i32
    %c0_i32_1 = arith.constant 0 : i32
    %c0_i32_2 = arith.constant 0 : i32
    return %c0_i32, %c0_i32_0, %c0_i32_1 : i32, i32, i32
  }
  func.func @transform_2(%arg0: i32) -> (i32, i32) {
    %c0_i32 = arith.constant 0 : i32
    %c0_i32_0 = arith.constant 0 : i32
    %c0_i32_1 = arith.constant 0 : i32
    return %c0_i32, %c0_i32_0 : i32, i32
  }
  func.func @transform_3(%arg0: i32) -> (i32, i32, i32) {
    %c0_i32 = arith.constant 0 : i32
    %c0_i32_0 = arith.constant 0 : i32
    %c0_i32_1 = arith.constant 0 : i32
    %c0_i32_2 = arith.constant 0 : i32
    return %c0_i32, %c0_i32_0, %c0_i32_1 : i32, i32, i32
  }
  func.func @transform_4(%arg0: i32) -> (i32, i32) {
    %c0_i32 = arith.constant 0 : i32
    %c0_i32_0 = arith.constant 0 : i32
    %c0_i32_1 = arith.constant 0 : i32
    return %c0_i32, %c0_i32_0 : i32, i32
  }
  func.func @transform_5(%arg0: i32) -> (i32, i32, i32) {
    %c0_i32 = arith.constant 0 : i32
    %c0_i32_0 = arith.constant 0 : i32
    %c0_i32_1 = arith.constant 0 : i32
    return %arg0, %c0_i32, %c0_i32_0 : i32, i32, i32
  }
}

</mosaic_0001>

<llo_original>
// kernel: forward.1
$region0: #{forward.1}
  #allocation0 [shape = 'u32[]', space=smem, size = 0x4, offset = 0x4, fixed_abs, tag = 'smem constant byte address 0x4 - core index']
  #allocation1 [shape = 'u32[144,128]{1,0:T(1,128)}', space=vmem, size = 0x12000, scoped, tag = 'internal scratch']
  #allocation2 [shape = 'f32[14,128]{1,0:T(8,128)}', space=vmem, size = 0x2000, scoped, tag = 'scratch operand']
  #allocation3 [shape = 'f32[12,128]{1,0:T(8,128)}', space=vmem, size = 0x2000, scoped, tag = 'scratch operand']
  %s0 = inlined_call_operand.vmem [shape: f32[2,16,128], index: 0, kind: input, shape index: {}]
  %s1 = inlined_call_operand.hbm [shape: f32[3,128,128], index: 1, kind: input, shape index: {}]
  %s2 = inlined_call_operand.vmem [shape: f32[1,128], index: 2, kind: input, shape index: {}]
  %s3 = inlined_call_operand.vmem [shape: f32[3,128,128], index: 3, kind: input, shape index: {}]
  %s4 = inlined_call_operand.vmem [shape: f32[1,128], index: 4, kind: input, shape index: {}]
  %s5 = inlined_call_operand.vmem [shape: f32[2,10,128], index: 5, kind: output, shape index: {}]
  %s6 = sld [smem:[#allocation0]]
  $region57: #{forward.1} parent=0
    _
  %s8 = ssub.s32 1, %s6
  %s9 = scalar_select 0, %s8, %s6
  $region1: #{forward.1} parent=0
    #allocation4 [shape = 'u8[196608]{0}', space=vmem, size = 0x30000, scoped, tag = 'input window, operand 1, single buffered']
    #allocation5 [shape = 's32[2]{0}', space=sflag, size = 0x8, scoped, tag = 'scoped memory for forward.1']
    %10 = vsyncpa [#allocation5], 0
    loop: start=0, step=1, limit=4
    $region2: #{forward.1} parent=1 // loop_pre_header
      _
    $region3: #{forward.1} parent=1 // loop_header
      %s12 = sphi 0, %s16
      %p13 = scmp.ge.s32.totalorder %s12, 4
      %s22 = sphi 0, %s24
      %s25 = sphi 0, %s22
      %s26 = sphi 0, %s25
      %s42 = sphi 0, %s26
      %s46 = sphi 0, %s46
      %s48 = sphi 0, %s46
      %s49 = sphi 0, %s48
      %s63 = sphi 0, %s49
      %s67 = sphi 0, %s67
      %s69 = sphi 0, %s67
      %s70 = sphi 0, %s69
      %s84 = sphi 0, %s70
      %s88 = sphi 0, %s88
      %s90 = sphi 0, %s88
      %s91 = sphi 0, %s90
      %s105 = sphi 0, %s91
      %s109 = sphi 0, %s109
      %s111 = sphi 0, %s109
      %s112 = sphi 0, %s111
      %s126 = sphi 0, %s112
      %s132 = sphi 0, %s134
      %s135 = sphi 0, %s132
      %s136 = sphi 0, %s135
      %s152 = sphi 0, %s136
    $region4: #{forward.1} parent=1 // loop_header_branch
      %15 = sbr.rel (%p13) target = $region8
    $region5: #{forward.1} parent=1 // loop_body
      %s17 = ssub.s32 %s12, 1
      %s18 = ssub.s32 %s12, 2
      %s19 = sadd.s32 %s12, 1
      %s20 = ssub.s32 %s12, %s19
      %p21 = scmp.eq.s32.totalorder %s20, 0
      %s23 = sadd.s32 %s22, 1
      %s24 = scalar_select %p21, %s22, %s23
      %p27 = pneg %p21
      %p28 = scmp.eq.s32.totalorder %s12, 1
      %p29 = por %p27, %p28
      %p30 = scmp.ne.s32.totalorder %s22, %s25
      %p31 = scmp.eq.s32.totalorder %s12, 0
      %p32 = por %p30, %p31
      %p33 = scmp.ne.s32.totalorder %s22, %s25
      %p34 = scmp.eq.s32.totalorder %s17, 1
      %p35 = por %p33, %p34
      %p36 = scmp.ne.s32.totalorder %s25, %s26
      %p37 = scmp.eq.s32.totalorder %s17, 0
      %p38 = por %p36, %p37
      %p39 = scmp.ne.s32.totalorder %s25, %s26
      %p40 = scmp.eq.s32.totalorder %s18, 1
      %p41 = por %p39, %p40
      %p43 = scmp.ne.s32.totalorder %s26, %s42
      %p44 = scmp.eq.s32.totalorder %s18, 0
      %p45 = por %p43, %p44
      %s47 = sadd.s32 %s46, 1
      %p50 = scmp.eq.s32.totalorder %s12, 1
      %p51 = scmp.ne.s32.totalorder %s46, %s48
      %p52 = scmp.eq.s32.totalorder %s12, 0
      %p53 = por %p51, %p52
      %p54 = scmp.ne.s32.totalorder %s46, %s48
      %p55 = scmp.eq.s32.totalorder %s17, 1
      %p56 = por %p54, %p55
      %p57 = scmp.ne.s32.totalorder %s48, %s49
      %p58 = scmp.eq.s32.totalorder %s17, 0
      %p59 = por %p57, %p58
      %p60 = scmp.ne.s32.totalorder %s48, %s49
      %p61 = scmp.eq.s32.totalorder %s18, 1
      %p62 = por %p60, %p61
      %p64 = scmp.ne.s32.totalorder %s49, %s63
      %p65 = scmp.eq.s32.totalorder %s18, 0
      %p66 = por %p64, %p65
      %s68 = sadd.s32 %s67, 1
      %p71 = scmp.eq.s32.totalorder %s12, 1
      %p72 = scmp.ne.s32.totalorder %s67, %s69
      %p73 = scmp.eq.s32.totalorder %s12, 0
      %p74 = por %p72, %p73
      %p75 = scmp.ne.s32.totalorder %s67, %s69
      %p76 = scmp.eq.s32.totalorder %s17, 1
      %p77 = por %p75, %p76
      %p78 = scmp.ne.s32.totalorder %s69, %s70
      %p79 = scmp.eq.s32.totalorder %s17, 0
      %p80 = por %p78, %p79
      %p81 = scmp.ne.s32.totalorder %s69, %s70
      %p82 = scmp.eq.s32.totalorder %s18, 1
      %p83 = por %p81, %p82
      %p85 = scmp.ne.s32.totalorder %s70, %s84
      %p86 = scmp.eq.s32.totalorder %s18, 0
      %p87 = por %p85, %p86
      %s89 = sadd.s32 %s88, 1
      %p92 = scmp.eq.s32.totalorder %s12, 1
      %p93 = scmp.ne.s32.totalorder %s88, %s90
      %p94 = scmp.eq.s32.totalorder %s12, 0
      %p95 = por %p93, %p94
      %p96 = scmp.ne.s32.totalorder %s88, %s90
      %p97 = scmp.eq.s32.totalorder %s17, 1
      %p98 = por %p96, %p97
      %p99 = scmp.ne.s32.totalorder %s90, %s91
      %p100 = scmp.eq.s32.totalorder %s17, 0
      %p101 = por %p99, %p100
      %p102 = scmp.ne.s32.totalorder %s90, %s91
      %p103 = scmp.eq.s32.totalorder %s18, 1
      %p104 = por %p102, %p103
      %p106 = scmp.ne.s32.totalorder %s91, %s105
      %p107 = scmp.eq.s32.totalorder %s18, 0
      %p108 = por %p106, %p107
      %s110 = sadd.s32 %s109, 1
      %p113 = scmp.eq.s32.totalorder %s12, 1
      %p114 = scmp.ne.s32.totalorder %s109, %s111
      %p115 = scmp.eq.s32.totalorder %s12, 0
      %p116 = por %p114, %p115
      %p117 = scmp.ne.s32.totalorder %s109, %s111
      %p118 = scmp.eq.s32.totalorder %s17, 1
      %p119 = por %p117, %p118
      %p120 = scmp.ne.s32.totalorder %s111, %s112
      %p121 = scmp.eq.s32.totalorder %s17, 0
      %p122 = por %p120, %p121
      %p123 = scmp.ne.s32.totalorder %s111, %s112
      %p124 = scmp.eq.s32.totalorder %s18, 1
      %p125 = por %p123, %p124
      %p127 = scmp.ne.s32.totalorder %s112, %s126
      %p128 = scmp.eq.s32.totalorder %s18, 0
      %p129 = por %p127, %p128
      %s130 = ssub.s32 %s12, %s19
      %p131 = scmp.eq.s32.totalorder %s130, 0
      %s133 = sadd.s32 %s132, 1
      %s134 = scalar_select %p131, %s132, %s133
      %p137 = pneg %p131
      %p138 = scmp.eq.s32.totalorder %s12, 1
      %p139 = por %p137, %p138
      %p140 = scmp.ne.s32.totalorder %s132, %s135
      %p141 = scmp.eq.s32.totalorder %s12, 0
      %p142 = por %p140, %p141
      %p143 = scmp.ne.s32.totalorder %s132, %s135
      %p144 = scmp.eq.s32.totalorder %s17, 1
      %p145 = por %p143, %p144
      %p146 = scmp.ne.s32.totalorder %s135, %s136
      %p147 = scmp.eq.s32.totalorder %s17, 0
      %p148 = por %p146, %p147
      %p149 = scmp.ne.s32.totalorder %s135, %s136
      %p150 = scmp.eq.s32.totalorder %s18, 1
      %p151 = por %p149, %p150
      %p153 = scmp.ne.s32.totalorder %s136, %s152
      %p154 = scmp.eq.s32.totalorder %s18, 0
      %p155 = por %p153, %p154
      %p156 = scmp.le.s32.totalorder 1, %s12
      %p157 = scmp.lt.s32.totalorder %s12, 3
      %p158 = pnand %p156, %p157
      %p159 = pneg %p158
      // Predicated region
      $region9: #{forward.1} parent=5 // pred_check
        _
      $region10: #{forward.1} parent=5 // pred_check_branch
        %161 = sbr.rel (%p158) target = $region12
      $region11: #{forward.1} parent=5 // pred_region
        %s162 = ssub.s32 %s12, 1
        // Predicated region
        $region13: #{forward.1} parent=11 // pred_check
          %p163 = pneg %p59
        $region14: #{forward.1} parent=11 // pred_check_branch
          %165 = sbr.rel (%p163) target = $region16
        $region15: #{forward.1} parent=11 // pred_region
          %s167 = ssub.s32 6144, 6144
          %168 = vsyncadd [#allocation5], %s167
          %s169 = sshll.u32 [#allocation4], 4
          %s170 = int_to_ptr.vmem [resolvable:$true] %s169
          %175 = dma.hbm_to_vmem [thread:$0]  %s1, 6144, %s170, [#allocation5], 128, 128, 8
        $region16: #{forward.1} parent=11 // pred_fallthru
          _
        // Predicated region
        $region17: #{forward.1} parent=11 // pred_check
          %p176 = pneg %p80
        $region18: #{forward.1} parent=11 // pred_check_branch
          %178 = sbr.rel (%p176) target = $region20
        $region19: #{forward.1} parent=11 // pred_region
          _
        $region20: #{forward.1} parent=11 // pred_fallthru
          _
        // Predicated region
        $region21: #{forward.1} parent=11 // pred_check
          %p179 = pneg %p101
        $region22: #{forward.1} parent=11 // pred_check_branch
          %181 = sbr.rel (%p179) target = $region24
        $region23: #{forward.1} parent=11 // pred_region
          _
        $region24: #{forward.1} parent=11 // pred_fallthru
          _
        // Predicated region
        $region25: #{forward.1} parent=11 // pred_check
          %p182 = pneg %p122
        $region26: #{forward.1} parent=11 // pred_check_branch
          %184 = sbr.rel (%p182) target = $region28
        $region27: #{forward.1} parent=11 // pred_region
          _
        $region28: #{forward.1} parent=11 // pred_fallthru
          _
      $region12: #{forward.1} parent=5 // pred_fallthru
        _
      %p185 = scmp.lt.s32.totalorder %s12, 2
      // Predicated region
      $region29: #{forward.1} parent=5 // pred_check
        %p186 = pneg %p185
      $region30: #{forward.1} parent=5 // pred_check_branch
        %188 = sbr.rel (%p186) target = $region32
      $region31: #{forward.1} parent=5 // pred_region
        // Predicated region
        $region33: #{forward.1} parent=31 // pred_check
          %p189 = pneg %p32
        $region34: #{forward.1} parent=31 // pred_check_branch
          %191 = sbr.rel (%p189) target = $region36
        $region35: #{forward.1} parent=31 // pred_region
          %p192 = scmp.lt.s32.totalorder %s12, 1
          %s193 = scalar_select %p192, %s12, 1
          %s194 = smul.addr %s193, 2
          %s195 = smul.addr %s194, 8
          %s196 = scalar_lea.vmem %s0, %s195
        $region36: #{forward.1} parent=31 // pred_fallthru
          _
      $region32: #{forward.1} parent=5 // pred_fallthru
        _
      %p197 = scmp.le.s32.totalorder 1, %s12
      %p198 = scmp.lt.s32.totalorder %s12, 3
      %p199 = pnand %p197, %p198
      %p200 = pneg %p199
      // Predicated region
      $region37: #{forward.1} parent=5 // pred_check
        _
      $region38: #{forward.1} parent=5 // pred_check_branch
        %202 = sbr.rel (%p199) target = $region40
      $region39: #{forward.1} parent=5 // pred_region
        %s203 = ssub.s32 %s12, 1
        // Predicated region
        $region41: #{forward.1} parent=39 // pred_check
          %p204 = pneg %p59
        $region42: #{forward.1} parent=39 // pred_check_branch
          %206 = sbr.rel (%p204) target = $region44
        $region43: #{forward.1} parent=39 // pred_region
          %207 = dma.done [#allocation5], 6144
        $region44: #{forward.1} parent=39 // pred_fallthru
          _
        %p208 = scmp.lt.s32.totalorder %s17, 1
        %s209 = scalar_select %p208, %s17, 1
        %s210 = smul.addr %s209, 2
        %s211 = smul.addr %s210, 8
        %s212 = scalar_lea.vmem %s0, %s211
        %p213 = pneg %p38
        %p214 = pneg %p35
        %p215 = pneg %p59
        %p216 = pneg %p56
        %p217 = pneg %p80
        %p218 = pneg %p77
        %p219 = pneg %p101
        %p220 = pneg %p98
        %p221 = pneg %p122
        %p222 = pneg %p119
        %p223 = pneg %p148
        %p224 = pneg %p145
        %p225 = scmp.lt.s32.totalorder %s17, 1
        %s226 = scalar_select %p225, %s17, 1
        %s227 = smul.addr %s226, 2
        %s228 = smul.addr %s227, 8
        %s229 = scalar_lea.vmem %s5, %s228
        %p230 = scmp.lt.s32.totalorder %s17, 1
        %s231 = scalar_select %p230, %s17, 1
        %s232 = smul.addr %s231, 2
        %s233 = smul.addr %s232, 8
        %s234 = scalar_lea.vmem %s0, %s233
        %p235 = scmp.lt.s32.totalorder %s17, 1
        %s236 = scalar_select %p235, %s17, 1
        %s237 = smul.addr %s236, 2
        %s238 = smul.addr %s237, 8
        %s239 = scalar_lea.vmem %s5, %s238
        %v240 = vld [vmem:[%s2] sm:$0x1]
        %v242 = vlaneseq
        %v243 = vshrl.u32 %v242, 7
        %v244 = vsub.s32 0, %v243
        %v245 = vrot.slane %v240, %v244
        %v247 = vld [vmem:[%s234] sm:$0xff]
        %v248 = vld [vmem:[%s234 + $0x8] sm:$0x3f]
        %v249 = vld [vmem:[#allocation4] sm:$0xff]
        %v250 = vld [vmem:[#allocation4 + $0x8] sm:$0xff]
        %v251 = vld [vmem:[#allocation4 + $0x10] sm:$0xff]
        %v252 = vld [vmem:[#allocation4 + $0x18] sm:$0xff]
        %v253 = vld [vmem:[#allocation4 + $0x20] sm:$0xff]
        %v254 = vld [vmem:[#allocation4 + $0x28] sm:$0xff]
        %v255 = vld [vmem:[#allocation4 + $0x30] sm:$0xff]
        %v256 = vld [vmem:[#allocation4 + $0x38] sm:$0xff]
        %v257 = vld [vmem:[#allocation4 + $0x40] sm:$0xff]
        %v258 = vld [vmem:[#allocation4 + $0x48] sm:$0xff]
        %v259 = vld [vmem:[#allocation4 + $0x50] sm:$0xff]
        %v260 = vld [vmem:[#allocation4 + $0x58] sm:$0xff]
        %v261 = vld [vmem:[#allocation4 + $0x60] sm:$0xff]
        %v262 = vld [vmem:[#allocation4 + $0x68] sm:$0xff]
        %v263 = vld [vmem:[#allocation4 + $0x70] sm:$0xff]
        %v264 = vld [vmem:[#allocation4 + $0x78] sm:$0xff]
        %265 = vmatprep.subr.mxu0 0.0
        %266 = vmatpush1.msra.mxu0 %v264
        %267 = vmatprep.subr.mxu0 0.0
        %268 = vmatpush1.msra.mxu0 %v263
        %269 = vmatprep.subr.mxu0 0.0
        %270 = vmatpush1.msra.mxu0 %v262
        %271 = vmatprep.subr.mxu0 0.0
        %272 = vmatpush1.msra.mxu0 %v261
        %273 = vmatprep.subr.mxu0 0.0
        %274 = vmatpush1.msra.mxu0 %v260
        %275 = vmatprep.subr.mxu0 0.0
        %276 = vmatpush1.msra.mxu0 %v259
        %277 = vmatprep.subr.mxu0 0.0
        %278 = vmatpush1.msra.mxu0 %v258
        %279 = vmatprep.subr.mxu0 0.0
        %280 = vmatpush1.msra.mxu0 %v257
        %281 = vmatprep.subr.mxu0 0.0
        %282 = vmatpush1.msra.mxu0 %v256
        %283 = vmatprep.subr.mxu0 0.0
        %284 = vmatpush1.msra.mxu0 %v255
        %285 = vmatprep.subr.mxu0 0.0
        %286 = vmatpush1.msra.mxu0 %v254
        %287 = vmatprep.subr.mxu0 0.0
        %288 = vmatpush1.msra.mxu0 %v253
        %289 = vmatprep.subr.mxu0 0.0
        %290 = vmatpush1.msra.mxu0 %v252
        %291 = vmatprep.subr.mxu0 0.0
        %292 = vmatpush1.msra.mxu0 %v251
        %293 = vmatprep.subr.mxu0 0.0
        %294 = vmatpush1.msra.mxu0 %v250
        %295 = vmatprep.subr.mxu0 0.0
        %296 = vmatpush1.msra.mxu0 %v249
        %297 = vmatprep.subr.mxu0 0.0
        %298 = vmatpush2.msra.mxu0 0.0
        %299 = vmatprep.subr.mxu0 0.0
        %300 = vmatpush2.msra.mxu0 0.0
        %301 = vmatprep.subr.mxu0 0.0
        %302 = vmatpush2.msra.mxu0 0.0
        %303 = vmatprep.subr.mxu0 0.0
        %304 = vmatpush2.msra.mxu0 0.0
        %305 = vmatprep.subr.mxu0 0.0
        %306 = vmatpush2.msra.mxu0 0.0
        %307 = vmatprep.subr.mxu0 0.0
        %308 = vmatpush2.msra.mxu0 0.0
        %309 = vmatprep.subr.mxu0 0.0
        %310 = vmatpush2.msra.mxu0 0.0
        %311 = vmatprep.subr.mxu0 0.0
        %312 = vmatpush2.msra.mxu0 0.0
        %313 = vmatprep.subr.mxu0 0.0
        %314 = vmatpush2.msra.mxu0 0.0
        %315 = vmatprep.subr.mxu0 0.0
        %316 = vmatpush2.msra.mxu0 0.0
        %317 = vmatprep.subr.mxu0 0.0
        %318 = vmatpush2.msra.mxu0 0.0
        %319 = vmatprep.subr.mxu0 0.0
        %320 = vmatpush2.msra.mxu0 0.0
        %321 = vmatprep.subr.mxu0 0.0
        %322 = vmatpush2.msra.mxu0 0.0
        %323 = vmatprep.subr.mxu0 0.0
        %324 = vmatpush2.msra.mxu0 0.0
        %325 = vmatprep.subr.mxu0 0.0
        %326 = vmatpush2.msra.mxu0 0.0
        %327 = vmatprep.subr.mxu0 0.0
        %328 = vmatpush2.msra.mxu0 0.0
        %329 = vmatprep.mubr.f32.mxu0 0.0
        %330 = vmatmul.mubr.f32.gmra.mxu0 %v247
        %v331 = vpop.f32.mrf.mxu0
        %v332 = vadd.f32 0.0, %v331
        %v333 = vpop.f32.mrf.mxu0
        %334 = vmatprep.mubr.f32.mxu0 0.0
        %335 = vmatmul.mubr.f32.gmra.mxu0 %v248
        %v336 = vpop.f32.mrf.mxu0
        %v337 = vadd.f32 0.0, %v336
        %v338 = vpop.f32.mrf.mxu0
        %339 = vdwg.mxu0
        %v340 = vadd.f32 %v245, %v332
        %v341 = vadd.f32 %v245, %v337
        %v342 = vld [vmem:[%s234 + $0x1] sm:$0xff]
        %v343 = vld [vmem:[%s234 + $0x9] sm:$0x3f]
        %s344 = scalar_lea.vmem [#allocation4], 128
        %v345 = vld [vmem:[%s344] sm:$0xff]
        %v346 = vld [vmem:[%s344 + $0x8] sm:$0xff]
        %v347 = vld [vmem:[%s344 + $0x10] sm:$0xff]
        %v348 = vld [vmem:[%s344 + $0x18] sm:$0xff]
        %v349 = vld [vmem:[%s344 + $0x20] sm:$0xff]
        %v350 = vld [vmem:[%s344 + $0x28] sm:$0xff]
        %v351 = vld [vmem:[%s344 + $0x30] sm:$0xff]
        %v352 = vld [vmem:[%s344 + $0x38] sm:$0xff]
        %v353 = vld [vmem:[%s344 + $0x40] sm:$0xff]
        %v354 = vld [vmem:[%s344 + $0x48] sm:$0xff]
        %v355 = vld [vmem:[%s344 + $0x50] sm:$0xff]
        %v356 = vld [vmem:[%s344 + $0x58] sm:$0xff]
        %v357 = vld [vmem:[%s344 + $0x60] sm:$0xff]
        %v358 = vld [vmem:[%s344 + $0x68] sm:$0xff]
        %v359 = vld [vmem:[%s344 + $0x70] sm:$0xff]
        %v360 = vld [vmem:[%s344 + $0x78] sm:$0xff]
        %361 = vmatprep.subr.mxu0 0.0
        %362 = vmatpush1.msra.mxu0 %v360
        %363 = vmatprep.subr.mxu0 0.0
        %364 = vmatpush1.msra.mxu0 %v359
        %365 = vmatprep.subr.mxu0 0.0
        %366 = vmatpush1.msra.mxu0 %v358
        %367 = vmatprep.subr.mxu0 0.0
        %368 = vmatpush1.msra.mxu0 %v357
        %369 = vmatprep.subr.mxu0 0.0
        %370 = vmatpush1.msra.mxu0 %v356
        %371 = vmatprep.subr.mxu0 0.0
        %372 = vmatpush1.msra.mxu0 %v355
        %373 = vmatprep.subr.mxu0 0.0
        %374 = vmatpush1.msra.mxu0 %v354
        %375 = vmatprep.subr.mxu0 0.0
        %376 = vmatpush1.msra.mxu0 %v353
        %377 = vmatprep.subr.mxu0 0.0
        %378 = vmatpush1.msra.mxu0 %v352
        %379 = vmatprep.subr.mxu0 0.0
        %380 = vmatpush1.msra.mxu0 %v351
        %381 = vmatprep.subr.mxu0 0.0
        %382 = vmatpush1.msra.mxu0 %v350
        %383 = vmatprep.subr.mxu0 0.0
        %384 = vmatpush1.msra.mxu0 %v349
        %385 = vmatprep.subr.mxu0 0.0
        %386 = vmatpush1.msra.mxu0 %v348
        %387 = vmatprep.subr.mxu0 0.0
        %388 = vmatpush1.msra.mxu0 %v347
        %389 = vmatprep.subr.mxu0 0.0
        %390 = vmatpush1.msra.mxu0 %v346
        %391 = vmatprep.subr.mxu0 0.0
        %392 = vmatpush1.msra.mxu0 %v345
        %393 = vmatprep.subr.mxu0 0.0
        %394 = vmatpush2.msra.mxu0 0.0
        %395 = vmatprep.subr.mxu0 0.0
        %396 = vmatpush2.msra.mxu0 0.0
        %397 = vmatprep.subr.mxu0 0.0
        %398 = vmatpush2.msra.mxu0 0.0
        %399 = vmatprep.subr.mxu0 0.0
        %400 = vmatpush2.msra.mxu0 0.0
        %401 = vmatprep.subr.mxu0 0.0
        %402 = vmatpush2.msra.mxu0 0.0
        %403 = vmatprep.subr.mxu0 0.0
        %404 = vmatpush2.msra.mxu0 0.0
        %405 = vmatprep.subr.mxu0 0.0
        %406 = vmatpush2.msra.mxu0 0.0
        %407 = vmatprep.subr.mxu0 0.0
        %408 = vmatpush2.msra.mxu0 0.0
        %409 = vmatprep.subr.mxu0 0.0
        %410 = vmatpush2.msra.mxu0 0.0
        %411 = vmatprep.subr.mxu0 0.0
        %412 = vmatpush2.msra.mxu0 0.0
        %413 = vmatprep.subr.mxu0 0.0
        %414 = vmatpush2.msra.mxu0 0.0
        %415 = vmatprep.subr.mxu0 0.0
        %416 = vmatpush2.msra.mxu0 0.0
        %417 = vmatprep.subr.mxu0 0.0
        %418 = vmatpush2.msra.mxu0 0.0
        %419 = vmatprep.subr.mxu0 0.0
        %420 = vmatpush2.msra.mxu0 0.0
        %421 = vmatprep.subr.mxu0 0.0
        %422 = vmatpush2.msra.mxu0 0.0
        %423 = vmatprep.subr.mxu0 0.0
        %424 = vmatpush2.msra.mxu0 0.0
        %425 = vmatprep.mubr.f32.mxu0 0.0
        %426 = vmatmul.mubr.f32.gmra.mxu0 %v342
        %v427 = vpop.f32.mrf.mxu0
        %v428 = vadd.f32 0.0, %v427
        %v429 = vpop.f32.mrf.mxu0
        %430 = vmatprep.mubr.f32.mxu0 0.0
        %431 = vmatmul.mubr.f32.gmra.mxu0 %v343
        %v432 = vpop.f32.mrf.mxu0
        %v433 = vadd.f32 0.0, %v432
        %v434 = vpop.f32.mrf.mxu0
        %435 = vdwg.mxu0
        %v436 = vadd.f32 %v340, %v428
        %v437 = vadd.f32 %v341, %v433
        %v438 = vld [vmem:[%s234 + $0x2] sm:$0xff]
        %v439 = vld [vmem:[%s234 + $0xa] sm:$0x3f]
        %s440 = scalar_lea.vmem [#allocation4], 256
        %v441 = vld [vmem:[%s440] sm:$0xff]
        %v442 = vld [vmem:[%s440 + $0x8] sm:$0xff]
        %v443 = vld [vmem:[%s440 + $0x10] sm:$0xff]
        %v444 = vld [vmem:[%s440 + $0x18] sm:$0xff]
        %v445 = vld [vmem:[%s440 + $0x20] sm:$0xff]
        %v446 = vld [vmem:[%s440 + $0x28] sm:$0xff]
        %v447 = vld [vmem:[%s440 + $0x30] sm:$0xff]
        %v448 = vld [vmem:[%s440 + $0x38] sm:$0xff]
        %v449 = vld [vmem:[%s440 + $0x40] sm:$0xff]
        %v450 = vld [vmem:[%s440 + $0x48] sm:$0xff]
        %v451 = vld [vmem:[%s440 + $0x50] sm:$0xff]
        %v452 = vld [vmem:[%s440 + $0x58] sm:$0xff]
        %v453 = vld [vmem:[%s440 + $0x60] sm:$0xff]
        %v454 = vld [vmem:[%s440 + $0x68] sm:$0xff]
        %v455 = vld [vmem:[%s440 + $0x70] sm:$0xff]
        %v456 = vld [vmem:[%s440 + $0x78] sm:$0xff]
        %457 = vmatprep.subr.mxu0 0.0
        %458 = vmatpush1.msra.mxu0 %v456
        %459 = vmatprep.subr.mxu0 0.0
        %460 = vmatpush1.msra.mxu0 %v455
        %461 = vmatprep.subr.mxu0 0.0
        %462 = vmatpush1.msra.mxu0 %v454
        %463 = vmatprep.subr.mxu0 0.0
        %464 = vmatpush1.msra.mxu0 %v453
        %465 = vmatprep.subr.mxu0 0.0
        %466 = vmatpush1.msra.mxu0 %v452
        %467 = vmatprep.subr.mxu0 0.0
        %468 = vmatpush1.msra.mxu0 %v451
        %469 = vmatprep.subr.mxu0 0.0
        %470 = vmatpush1.msra.mxu0 %v450
        %471 = vmatprep.subr.mxu0 0.0
        %472 = vmatpush1.msra.mxu0 %v449
        %473 = vmatprep.subr.mxu0 0.0
        %474 = vmatpush1.msra.mxu0 %v448
        %475 = vmatprep.subr.mxu0 0.0
        %476 = vmatpush1.msra.mxu0 %v447
        %477 = vmatprep.subr.mxu0 0.0
        %478 = vmatpush1.msra.mxu0 %v446
        %479 = vmatprep.subr.mxu0 0.0
        %480 = vmatpush1.msra.mxu0 %v445
        %481 = vmatprep.subr.mxu0 0.0
        %482 = vmatpush1.msra.mxu0 %v444
        %483 = vmatprep.subr.mxu0 0.0
        %484 = vmatpush1.msra.mxu0 %v443
        %485 = vmatprep.subr.mxu0 0.0
        %486 = vmatpush1.msra.mxu0 %v442
        %487 = vmatprep.subr.mxu0 0.0
        %488 = vmatpush1.msra.mxu0 %v441
        %489 = vmatprep.subr.mxu0 0.0
        %490 = vmatpush2.msra.mxu0 0.0
        %491 = vmatprep.subr.mxu0 0.0
        %492 = vmatpush2.msra.mxu0 0.0
        %493 = vmatprep.subr.mxu0 0.0
        %494 = vmatpush2.msra.mxu0 0.0
        %495 = vmatprep.subr.mxu0 0.0
        %496 = vmatpush2.msra.mxu0 0.0
        %497 = vmatprep.subr.mxu0 0.0
        %498 = vmatpush2.msra.mxu0 0.0
        %499 = vmatprep.subr.mxu0 0.0
        %500 = vmatpush2.msra.mxu0 0.0
        %501 = vmatprep.subr.mxu0 0.0
        %502 = vmatpush2.msra.mxu0 0.0
        %503 = vmatprep.subr.mxu0 0.0
        %504 = vmatpush2.msra.mxu0 0.0
        %505 = vmatprep.subr.mxu0 0.0
        %506 = vmatpush2.msra.mxu0 0.0
        %507 = vmatprep.subr.mxu0 0.0
        %508 = vmatpush2.msra.mxu0 0.0
        %509 = vmatprep.subr.mxu0 0.0
        %510 = vmatpush2.msra.mxu0 0.0
        %511 = vmatprep.subr.mxu0 0.0
        %512 = vmatpush2.msra.mxu0 0.0
        %513 = vmatprep.subr.mxu0 0.0
        %514 = vmatpush2.msra.mxu0 0.0
        %515 = vmatprep.subr.mxu0 0.0
        %516 = vmatpush2.msra.mxu0 0.0
        %517 = vmatprep.subr.mxu0 0.0
        %518 = vmatpush2.msra.mxu0 0.0
        %519 = vmatprep.subr.mxu0 0.0
        %520 = vmatpush2.msra.mxu0 0.0
        %521 = vmatprep.mubr.f32.mxu0 0.0
        %522 = vmatmul.mubr.f32.gmra.mxu0 %v438
        %v523 = vpop.f32.mrf.mxu0
        %v524 = vadd.f32 0.0, %v523
        %v525 = vpop.f32.mrf.mxu0
        %526 = vmatprep.mubr.f32.mxu0 0.0
        %527 = vmatmul.mubr.f32.gmra.mxu0 %v439
        %v528 = vpop.f32.mrf.mxu0
        %v529 = vadd.f32 0.0, %v528
        %v530 = vpop.f32.mrf.mxu0
        %531 = vdwg.mxu0
        %v532 = vadd.f32 %v436, %v524
        %v533 = vadd.f32 %v437, %v529
        %534 = vst [vmem:[#allocation2] sm:$0xff] %v532
        %535 = vst [vmem:[#allocation2 + $0x8] sm:$0x3f] %v533
        %v536 = vld [vmem:[%s4] sm:$0x1]
        %v538 = vlaneseq
        %v539 = vshrl.u32 %v538, 7
        %v540 = vsub.s32 0, %v539
        %v541 = vrot.slane %v536, %v540
        %v543 = vld [vmem:[#allocation2] sm:$0xff]
        %v544 = vld [vmem:[#allocation2 + $0x8] sm:$0xf]
        %v545 = vld [vmem:[%s3] sm:$0xff]
        %v546 = vld [vmem:[%s3 + $0x8] sm:$0xff]
        %v547 = vld [vmem:[%s3 + $0x10] sm:$0xff]
        %v548 = vld [vmem:[%s3 + $0x18] sm:$0xff]
        %v549 = vld [vmem:[%s3 + $0x20] sm:$0xff]
        %v550 = vld [vmem:[%s3 + $0x28] sm:$0xff]
        %v551 = vld [vmem:[%s3 + $0x30] sm:$0xff]
        %v552 = vld [vmem:[%s3 + $0x38] sm:$0xff]
        %v553 = vld [vmem:[%s3 + $0x40] sm:$0xff]
        %v554 = vld [vmem:[%s3 + $0x48] sm:$0xff]
        %v555 = vld [vmem:[%s3 + $0x50] sm:$0xff]
        %v556 = vld [vmem:[%s3 + $0x58] sm:$0xff]
        %v557 = vld [vmem:[%s3 + $0x60] sm:$0xff]
        %v558 = vld [vmem:[%s3 + $0x68] sm:$0xff]
        %v559 = vld [vmem:[%s3 + $0x70] sm:$0xff]
        %v560 = vld [vmem:[%s3 + $0x78] sm:$0xff]
        %561 = vmatprep.subr.mxu0 0.0
        %562 = vmatpush1.msra.mxu0 %v560
        %563 = vmatprep.subr.mxu0 0.0
        %564 = vmatpush1.msra.mxu0 %v559
        %565 = vmatprep.subr.mxu0 0.0
        %566 = vmatpush1.msra.mxu0 %v558
        %567 = vmatprep.subr.mxu0 0.0
        %568 = vmatpush1.msra.mxu0 %v557
        %569 = vmatprep.subr.mxu0 0.0
        %570 = vmatpush1.msra.mxu0 %v556
        %571 = vmatprep.subr.mxu0 0.0
        %572 = vmatpush1.msra.mxu0 %v555
        %573 = vmatprep.subr.mxu0 0.0
        %574 = vmatpush1.msra.mxu0 %v554
        %575 = vmatprep.subr.mxu0 0.0
        %576 = vmatpush1.msra.mxu0 %v553
        %577 = vmatprep.subr.mxu0 0.0
        %578 = vmatpush1.msra.mxu0 %v552
        %579 = vmatprep.subr.mxu0 0.0
        %580 = vmatpush1.msra.mxu0 %v551
        %581 = vmatprep.subr.mxu0 0.0
        %582 = vmatpush1.msra.mxu0 %v550
        %583 = vmatprep.subr.mxu0 0.0
        %584 = vmatpush1.msra.mxu0 %v549
        %585 = vmatprep.subr.mxu0 0.0
        %586 = vmatpush1.msra.mxu0 %v548
        %587 = vmatprep.subr.mxu0 0.0
        %588 = vmatpush1.msra.mxu0 %v547
        %589 = vmatprep.subr.mxu0 0.0
        %590 = vmatpush1.msra.mxu0 %v546
        %591 = vmatprep.subr.mxu0 0.0
        %592 = vmatpush1.msra.mxu0 %v545
        %593 = vmatprep.subr.mxu0 0.0
        %594 = vmatpush2.msra.mxu0 0.0
        %595 = vmatprep.subr.mxu0 0.0
        %596 = vmatpush2.msra.mxu0 0.0
        %597 = vmatprep.subr.mxu0 0.0
        %598 = vmatpush2.msra.mxu0 0.0
        %599 = vmatprep.subr.mxu0 0.0
        %600 = vmatpush2.msra.mxu0 0.0
        %601 = vmatprep.subr.mxu0 0.0
        %602 = vmatpush2.msra.mxu0 0.0
        %603 = vmatprep.subr.mxu0 0.0
        %604 = vmatpush2.msra.mxu0 0.0
        %605 = vmatprep.subr.mxu0 0.0
        %606 = vmatpush2.msra.mxu0 0.0
        %607 = vmatprep.subr.mxu0 0.0
        %608 = vmatpush2.msra.mxu0 0.0
        %609 = vmatprep.subr.mxu0 0.0
        %610 = vmatpush2.msra.mxu0 0.0
        %611 = vmatprep.subr.mxu0 0.0
        %612 = vmatpush2.msra.mxu0 0.0
        %613 = vmatprep.subr.mxu0 0.0
        %614 = vmatpush2.msra.mxu0 0.0
        %615 = vmatprep.subr.mxu0 0.0
        %616 = vmatpush2.msra.mxu0 0.0
        %617 = vmatprep.subr.mxu0 0.0
        %618 = vmatpush2.msra.mxu0 0.0
        %619 = vmatprep.subr.mxu0 0.0
        %620 = vmatpush2.msra.mxu0 0.0
        %621 = vmatprep.subr.mxu0 0.0
        %622 = vmatpush2.msra.mxu0 0.0
        %623 = vmatprep.subr.mxu0 0.0
        %624 = vmatpush2.msra.mxu0 0.0
        %625 = vmatprep.mubr.f32.mxu0 0.0
        %626 = vmatmul.mubr.f32.gmra.mxu0 %v543
        %v627 = vpop.f32.mrf.mxu0
        %v628 = vadd.f32 0.0, %v627
        %v629 = vpop.f32.mrf.mxu0
        %630 = vmatprep.mubr.f32.mxu0 0.0
        %631 = vmatmul.mubr.f32.gmra.mxu0 %v544
        %v632 = vpop.f32.mrf.mxu0
        %v633 = vadd.f32 0.0, %v632
        %v634 = vpop.f32.mrf.mxu0
        %635 = vdwg.mxu0
        %v636 = vadd.f32 %v541, %v628
        %v637 = vadd.f32 %v541, %v633
        %v638 = vld [vmem:[#allocation2 + $0x1] sm:$0xff]
        %v639 = vld [vmem:[#allocation2 + $0x9] sm:$0xf]
        %s640 = scalar_lea.vmem %s3, 128
        %v641 = vld [vmem:[%s640] sm:$0xff]
        %v642 = vld [vmem:[%s640 + $0x8] sm:$0xff]
        %v643 = vld [vmem:[%s640 + $0x10] sm:$0xff]
        %v644 = vld [vmem:[%s640 + $0x18] sm:$0xff]
        %v645 = vld [vmem:[%s640 + $0x20] sm:$0xff]
        %v646 = vld [vmem:[%s640 + $0x28] sm:$0xff]
        %v647 = vld [vmem:[%s640 + $0x30] sm:$0xff]
        %v648 = vld [vmem:[%s640 + $0x38] sm:$0xff]
        %v649 = vld [vmem:[%s640 + $0x40] sm:$0xff]
        %v650 = vld [vmem:[%s640 + $0x48] sm:$0xff]
        %v651 = vld [vmem:[%s640 + $0x50] sm:$0xff]
        %v652 = vld [vmem:[%s640 + $0x58] sm:$0xff]
        %v653 = vld [vmem:[%s640 + $0x60] sm:$0xff]
        %v654 = vld [vmem:[%s640 + $0x68] sm:$0xff]
        %v655 = vld [vmem:[%s640 + $0x70] sm:$0xff]
        %v656 = vld [vmem:[%s640 + $0x78] sm:$0xff]
        %657 = vmatprep.subr.mxu0 0.0
        %658 = vmatpush1.msra.mxu0 %v656
        %659 = vmatprep.subr.mxu0 0.0
        %660 = vmatpush1.msra.mxu0 %v655
        %661 = vmatprep.subr.mxu0 0.0
        %662 = vmatpush1.msra.mxu0 %v654
        %663 = vmatprep.subr.mxu0 0.0
        %664 = vmatpush1.msra.mxu0 %v653
        %665 = vmatprep.subr.mxu0 0.0
        %666 = vmatpush1.msra.mxu0 %v652
        %667 = vmatprep.subr.mxu0 0.0
        %668 = vmatpush1.msra.mxu0 %v651
        %669 = vmatprep.subr.mxu0 0.0
        %670 = vmatpush1.msra.mxu0 %v650
        %671 = vmatprep.subr.mxu0 0.0
        %672 = vmatpush1.msra.mxu0 %v649
        %673 = vmatprep.subr.mxu0 0.0
        %674 = vmatpush1.msra.mxu0 %v648
        %675 = vmatprep.subr.mxu0 0.0
        %676 = vmatpush1.msra.mxu0 %v647
        %677 = vmatprep.subr.mxu0 0.0
        %678 = vmatpush1.msra.mxu0 %v646
        %679 = vmatprep.subr.mxu0 0.0
        %680 = vmatpush1.msra.mxu0 %v645
        %681 = vmatprep.subr.mxu0 0.0
        %682 = vmatpush1.msra.mxu0 %v644
        %683 = vmatprep.subr.mxu0 0.0
        %684 = vmatpush1.msra.mxu0 %v643
        %685 = vmatprep.subr.mxu0 0.0
        %686 = vmatpush1.msra.mxu0 %v642
        %687 = vmatprep.subr.mxu0 0.0
        %688 = vmatpush1.msra.mxu0 %v641
        %689 = vmatprep.subr.mxu0 0.0
        %690 = vmatpush2.msra.mxu0 0.0
        %691 = vmatprep.subr.mxu0 0.0
        %692 = vmatpush2.msra.mxu0 0.0
        %693 = vmatprep.subr.mxu0 0.0
        %694 = vmatpush2.msra.mxu0 0.0
        %695 = vmatprep.subr.mxu0 0.0
        %696 = vmatpush2.msra.mxu0 0.0
        %697 = vmatprep.subr.mxu0 0.0
        %698 = vmatpush2.msra.mxu0 0.0
        %699 = vmatprep.subr.mxu0 0.0
        %700 = vmatpush2.msra.mxu0 0.0
        %701 = vmatprep.subr.mxu0 0.0
        %702 = vmatpush2.msra.mxu0 0.0
        %703 = vmatprep.subr.mxu0 0.0
        %704 = vmatpush2.msra.mxu0 0.0
        %705 = vmatprep.subr.mxu0 0.0
        %706 = vmatpush2.msra.mxu0 0.0
        %707 = vmatprep.subr.mxu0 0.0
        %708 = vmatpush2.msra.mxu0 0.0
        %709 = vmatprep.subr.mxu0 0.0
        %710 = vmatpush2.msra.mxu0 0.0
        %711 = vmatprep.subr.mxu0 0.0
        %712 = vmatpush2.msra.mxu0 0.0
        %713 = vmatprep.subr.mxu0 0.0
        %714 = vmatpush2.msra.mxu0 0.0
        %715 = vmatprep.subr.mxu0 0.0
        %716 = vmatpush2.msra.mxu0 0.0
        %717 = vmatprep.subr.mxu0 0.0
        %718 = vmatpush2.msra.mxu0 0.0
        %719 = vmatprep.subr.mxu0 0.0
        %720 = vmatpush2.msra.mxu0 0.0
        %721 = vmatprep.mubr.f32.mxu0 0.0
        %722 = vmatmul.mubr.f32.gmra.mxu0 %v638
        %v723 = vpop.f32.mrf.mxu0
        %v724 = vadd.f32 0.0, %v723
        %v725 = vpop.f32.mrf.mxu0
        %726 = vmatprep.mubr.f32.mxu0 0.0
        %727 = vmatmul.mubr.f32.gmra.mxu0 %v639
        %v728 = vpop.f32.mrf.mxu0
        %v729 = vadd.f32 0.0, %v728
        %v730 = vpop.f32.mrf.mxu0
        %731 = vdwg.mxu0
        %v732 = vadd.f32 %v636, %v724
        %v733 = vadd.f32 %v637, %v729
        %v734 = vld [vmem:[#allocation2 + $0x2] sm:$0xff]
        %v735 = vld [vmem:[#allocation2 + $0xa] sm:$0xf]
        %s736 = scalar_lea.vmem %s3, 256
        %v737 = vld [vmem:[%s736] sm:$0xff]
        %v738 = vld [vmem:[%s736 + $0x8] sm:$0xff]
        %v739 = vld [vmem:[%s736 + $0x10] sm:$0xff]
        %v740 = vld [vmem:[%s736 + $0x18] sm:$0xff]
        %v741 = vld [vmem:[%s736 + $0x20] sm:$0xff]
        %v742 = vld [vmem:[%s736 + $0x28] sm:$0xff]
        %v743 = vld [vmem:[%s736 + $0x30] sm:$0xff]
        %v744 = vld [vmem:[%s736 + $0x38] sm:$0xff]
        %v745 = vld [vmem:[%s736 + $0x40] sm:$0xff]
        %v746 = vld [vmem:[%s736 + $0x48] sm:$0xff]
        %v747 = vld [vmem:[%s736 + $0x50] sm:$0xff]
        %v748 = vld [vmem:[%s736 + $0x58] sm:$0xff]
        %v749 = vld [vmem:[%s736 + $0x60] sm:$0xff]
        %v750 = vld [vmem:[%s736 + $0x68] sm:$0xff]
        %v751 = vld [vmem:[%s736 + $0x70] sm:$0xff]
        %v752 = vld [vmem:[%s736 + $0x78] sm:$0xff]
        %753 = vmatprep.subr.mxu0 0.0
        %754 = vmatpush1.msra.mxu0 %v752
        %755 = vmatprep.subr.mxu0 0.0
        %756 = vmatpush1.msra.mxu0 %v751
        %757 = vmatprep.subr.mxu0 0.0
        %758 = vmatpush1.msra.mxu0 %v750
        %759 = vmatprep.subr.mxu0 0.0
        %760 = vmatpush1.msra.mxu0 %v749
        %761 = vmatprep.subr.mxu0 0.0
        %762 = vmatpush1.msra.mxu0 %v748
        %763 = vmatprep.subr.mxu0 0.0
        %764 = vmatpush1.msra.mxu0 %v747
        %765 = vmatprep.subr.mxu0 0.0
        %766 = vmatpush1.msra.mxu0 %v746
        %767 = vmatprep.subr.mxu0 0.0
        %768 = vmatpush1.msra.mxu0 %v745
        %769 = vmatprep.subr.mxu0 0.0
        %770 = vmatpush1.msra.mxu0 %v744
        %771 = vmatprep.subr.mxu0 0.0
        %772 = vmatpush1.msra.mxu0 %v743
        %773 = vmatprep.subr.mxu0 0.0
        %774 = vmatpush1.msra.mxu0 %v742
        %775 = vmatprep.subr.mxu0 0.0
        %776 = vmatpush1.msra.mxu0 %v741
        %777 = vmatprep.subr.mxu0 0.0
        %778 = vmatpush1.msra.mxu0 %v740
        %779 = vmatprep.subr.mxu0 0.0
        %780 = vmatpush1.msra.mxu0 %v739
        %781 = vmatprep.subr.mxu0 0.0
        %782 = vmatpush1.msra.mxu0 %v738
        %783 = vmatprep.subr.mxu0 0.0
        %784 = vmatpush1.msra.mxu0 %v737
        %785 = vmatprep.subr.mxu0 0.0
        %786 = vmatpush2.msra.mxu0 0.0
        %787 = vmatprep.subr.mxu0 0.0
        %788 = vmatpush2.msra.mxu0 0.0
        %789 = vmatprep.subr.mxu0 0.0
        %790 = vmatpush2.msra.mxu0 0.0
        %791 = vmatprep.subr.mxu0 0.0
        %792 = vmatpush2.msra.mxu0 0.0
        %793 = vmatprep.subr.mxu0 0.0
        %794 = vmatpush2.msra.mxu0 0.0
        %795 = vmatprep.subr.mxu0 0.0
        %796 = vmatpush2.msra.mxu0 0.0
        %797 = vmatprep.subr.mxu0 0.0
        %798 = vmatpush2.msra.mxu0 0.0
        %799 = vmatprep.subr.mxu0 0.0
        %800 = vmatpush2.msra.mxu0 0.0
        %801 = vmatprep.subr.mxu0 0.0
        %802 = vmatpush2.msra.mxu0 0.0
        %803 = vmatprep.subr.mxu0 0.0
        %804 = vmatpush2.msra.mxu0 0.0
        %805 = vmatprep.subr.mxu0 0.0
        %806 = vmatpush2.msra.mxu0 0.0
        %807 = vmatprep.subr.mxu0 0.0
        %808 = vmatpush2.msra.mxu0 0.0
        %809 = vmatprep.subr.mxu0 0.0
        %810 = vmatpush2.msra.mxu0 0.0
        %811 = vmatprep.subr.mxu0 0.0
        %812 = vmatpush2.msra.mxu0 0.0
        %813 = vmatprep.subr.mxu0 0.0
        %814 = vmatpush2.msra.mxu0 0.0
        %815 = vmatprep.subr.mxu0 0.0
        %816 = vmatpush2.msra.mxu0 0.0
        %817 = vmatprep.mubr.f32.mxu0 0.0
        %818 = vmatmul.mubr.f32.gmra.mxu0 %v734
        %v819 = vpop.f32.mrf.mxu0
        %v820 = vadd.f32 0.0, %v819
        %v821 = vpop.f32.mrf.mxu0
        %822 = vmatprep.mubr.f32.mxu0 0.0
        %823 = vmatmul.mubr.f32.gmra.mxu0 %v735
        %v824 = vpop.f32.mrf.mxu0
        %v825 = vadd.f32 0.0, %v824
        %v826 = vpop.f32.mrf.mxu0
        %827 = vdwg.mxu0
        %v828 = vadd.f32 %v732, %v820
        %v829 = vadd.f32 %v733, %v825
        %830 = vst [vmem:[#allocation3] sm:$0xff] %v828
        %831 = vst [vmem:[#allocation3 + $0x8] sm:$0xf] %v829
        %v832 = vld [vmem:[%s4] sm:$0x1]
        %v834 = vlaneseq
        %v835 = vshrl.u32 %v834, 7
        %v836 = vsub.s32 0, %v835
        %v837 = vrot.slane %v832, %v836
        %v839 = vld [vmem:[#allocation3] sm:$0xff]
        %v840 = vld [vmem:[#allocation3 + $0x8] sm:$0x3]
        %v841 = vld [vmem:[%s3] sm:$0xff]
        %v842 = vld [vmem:[%s3 + $0x8] sm:$0xff]
        %v843 = vld [vmem:[%s3 + $0x10] sm:$0xff]
        %v844 = vld [vmem:[%s3 + $0x18] sm:$0xff]
        %v845 = vld [vmem:[%s3 + $0x20] sm:$0xff]
        %v846 = vld [vmem:[%s3 + $0x28] sm:$0xff]
        %v847 = vld [vmem:[%s3 + $0x30] sm:$0xff]
        %v848 = vld [vmem:[%s3 + $0x38] sm:$0xff]
        %v849 = vld [vmem:[%s3 + $0x40] sm:$0xff]
        %v850 = vld [vmem:[%s3 + $0x48] sm:$0xff]
        %v851 = vld [vmem:[%s3 + $0x50] sm:$0xff]
        %v852 = vld [vmem:[%s3 + $0x58] sm:$0xff]
        %v853 = vld [vmem:[%s3 + $0x60] sm:$0xff]
        %v854 = vld [vmem:[%s3 + $0x68] sm:$0xff]
        %v855 = vld [vmem:[%s3 + $0x70] sm:$0xff]
        %v856 = vld [vmem:[%s3 + $0x78] sm:$0xff]
        %857 = vmatprep.subr.mxu0 0.0
        %858 = vmatpush1.msra.mxu0 %v856
        %859 = vmatprep.subr.mxu0 0.0
        %860 = vmatpush1.msra.mxu0 %v855
        %861 = vmatprep.subr.mxu0 0.0
        %862 = vmatpush1.msra.mxu0 %v854
        %863 = vmatprep.subr.mxu0 0.0
        %864 = vmatpush1.msra.mxu0 %v853
        %865 = vmatprep.subr.mxu0 0.0
        %866 = vmatpush1.msra.mxu0 %v852
        %867 = vmatprep.subr.mxu0 0.0
        %868 = vmatpush1.msra.mxu0 %v851
        %869 = vmatprep.subr.mxu0 0.0
        %870 = vmatpush1.msra.mxu0 %v850
        %871 = vmatprep.subr.mxu0 0.0
        %872 = vmatpush1.msra.mxu0 %v849
        %873 = vmatprep.subr.mxu0 0.0
        %874 = vmatpush1.msra.mxu0 %v848
        %875 = vmatprep.subr.mxu0 0.0
        %876 = vmatpush1.msra.mxu0 %v847
        %877 = vmatprep.subr.mxu0 0.0
        %878 = vmatpush1.msra.mxu0 %v846
        %879 = vmatprep.subr.mxu0 0.0
        %880 = vmatpush1.msra.mxu0 %v845
        %881 = vmatprep.subr.mxu0 0.0
        %882 = vmatpush1.msra.mxu0 %v844
        %883 = vmatprep.subr.mxu0 0.0
        %884 = vmatpush1.msra.mxu0 %v843
        %885 = vmatprep.subr.mxu0 0.0
        %886 = vmatpush1.msra.mxu0 %v842
        %887 = vmatprep.subr.mxu0 0.0
        %888 = vmatpush1.msra.mxu0 %v841
        %889 = vmatprep.subr.mxu0 0.0
        %890 = vmatpush2.msra.mxu0 0.0
        %891 = vmatprep.subr.mxu0 0.0
        %892 = vmatpush2.msra.mxu0 0.0
        %893 = vmatprep.subr.mxu0 0.0
        %894 = vmatpush2.msra.mxu0 0.0
        %895 = vmatprep.subr.mxu0 0.0
        %896 = vmatpush2.msra.mxu0 0.0
        %897 = vmatprep.subr.mxu0 0.0
        %898 = vmatpush2.msra.mxu0 0.0
        %899 = vmatprep.subr.mxu0 0.0
        %900 = vmatpush2.msra.mxu0 0.0
        %901 = vmatprep.subr.mxu0 0.0
        %902 = vmatpush2.msra.mxu0 0.0
        %903 = vmatprep.subr.mxu0 0.0
        %904 = vmatpush2.msra.mxu0 0.0
        %905 = vmatprep.subr.mxu0 0.0
        %906 = vmatpush2.msra.mxu0 0.0
        %907 = vmatprep.subr.mxu0 0.0
        %908 = vmatpush2.msra.mxu0 0.0
        %909 = vmatprep.subr.mxu0 0.0
        %910 = vmatpush2.msra.mxu0 0.0
        %911 = vmatprep.subr.mxu0 0.0
        %912 = vmatpush2.msra.mxu0 0.0
        %913 = vmatprep.subr.mxu0 0.0
        %914 = vmatpush2.msra.mxu0 0.0
        %915 = vmatprep.subr.mxu0 0.0
        %916 = vmatpush2.msra.mxu0 0.0
        %917 = vmatprep.subr.mxu0 0.0
        %918 = vmatpush2.msra.mxu0 0.0
        %919 = vmatprep.subr.mxu0 0.0
        %920 = vmatpush2.msra.mxu0 0.0
        %921 = vmatprep.mubr.f32.mxu0 0.0
        %922 = vmatmul.mubr.f32.gmra.mxu0 %v839
        %v923 = vpop.f32.mrf.mxu0
        %v924 = vadd.f32 0.0, %v923
        %v925 = vpop.f32.mrf.mxu0
        %926 = vmatprep.mubr.f32.mxu0 0.0
        %927 = vmatmul.mubr.f32.gmra.mxu0 %v840
        %v928 = vpop.f32.mrf.mxu0
        %v929 = vadd.f32 0.0, %v928
        %v930 = vpop.f32.mrf.mxu0
        %931 = vdwg.mxu0
        %v932 = vadd.f32 %v837, %v924
        %v933 = vadd.f32 %v837, %v929
        %v934 = vld [vmem:[#allocation3 + $0x1] sm:$0xff]
        %v935 = vld [vmem:[#allocation3 + $0x9] sm:$0x3]
        %v936 = vld [vmem:[%s640] sm:$0xff]
        %v937 = vld [vmem:[%s640 + $0x8] sm:$0xff]
        %v938 = vld [vmem:[%s640 + $0x10] sm:$0xff]
        %v939 = vld [vmem:[%s640 + $0x18] sm:$0xff]
        %v940 = vld [vmem:[%s640 + $0x20] sm:$0xff]
        %v941 = vld [vmem:[%s640 + $0x28] sm:$0xff]
        %v942 = vld [vmem:[%s640 + $0x30] sm:$0xff]
        %v943 = vld [vmem:[%s640 + $0x38] sm:$0xff]
        %v944 = vld [vmem:[%s640 + $0x40] sm:$0xff]
        %v945 = vld [vmem:[%s640 + $0x48] sm:$0xff]
        %v946 = vld [vmem:[%s640 + $0x50] sm:$0xff]
        %v947 = vld [vmem:[%s640 + $0x58] sm:$0xff]
        %v948 = vld [vmem:[%s640 + $0x60] sm:$0xff]
        %v949 = vld [vmem:[%s640 + $0x68] sm:$0xff]
        %v950 = vld [vmem:[%s640 + $0x70] sm:$0xff]
        %v951 = vld [vmem:[%s640 + $0x78] sm:$0xff]
        %952 = vmatprep.subr.mxu0 0.0
        %953 = vmatpush1.msra.mxu0 %v951
        %954 = vmatprep.subr.mxu0 0.0
        %955 = vmatpush1.msra.mxu0 %v950
        %956 = vmatprep.subr.mxu0 0.0
        %957 = vmatpush1.msra.mxu0 %v949
        %958 = vmatprep.subr.mxu0 0.0
        %959 = vmatpush1.msra.mxu0 %v948
        %960 = vmatprep.subr.mxu0 0.0
        %961 = vmatpush1.msra.mxu0 %v947
        %962 = vmatprep.subr.mxu0 0.0
        %963 = vmatpush1.msra.mxu0 %v946
        %964 = vmatprep.subr.mxu0 0.0
        %965 = vmatpush1.msra.mxu0 %v945
        %966 = vmatprep.subr.mxu0 0.0
        %967 = vmatpush1.msra.mxu0 %v944
        %968 = vmatprep.subr.mxu0 0.0
        %969 = vmatpush1.msra.mxu0 %v943
        %970 = vmatprep.subr.mxu0 0.0
        %971 = vmatpush1.msra.mxu0 %v942
        %972 = vmatprep.subr.mxu0 0.0
        %973 = vmatpush1.msra.mxu0 %v941
        %974 = vmatprep.subr.mxu0 0.0
        %975 = vmatpush1.msra.mxu0 %v940
        %976 = vmatprep.subr.mxu0 0.0
        %977 = vmatpush1.msra.mxu0 %v939
        %978 = vmatprep.subr.mxu0 0.0
        %979 = vmatpush1.msra.mxu0 %v938
        %980 = vmatprep.subr.mxu0 0.0
        %981 = vmatpush1.msra.mxu0 %v937
        %982 = vmatprep.subr.mxu0 0.0
        %983 = vmatpush1.msra.mxu0 %v936
        %984 = vmatprep.subr.mxu0 0.0
        %985 = vmatpush2.msra.mxu0 0.0
        %986 = vmatprep.subr.mxu0 0.0
        %987 = vmatpush2.msra.mxu0 0.0
        %988 = vmatprep.subr.mxu0 0.0
        %989 = vmatpush2.msra.mxu0 0.0
        %990 = vmatprep.subr.mxu0 0.0
        %991 = vmatpush2.msra.mxu0 0.0
        %992 = vmatprep.subr.mxu0 0.0
        %993 = vmatpush2.msra.mxu0 0.0
        %994 = vmatprep.subr.mxu0 0.0
        %995 = vmatpush2.msra.mxu0 0.0
        %996 = vmatprep.subr.mxu0 0.0
        %997 = vmatpush2.msra.mxu0 0.0
        %998 = vmatprep.subr.mxu0 0.0
        %999 = vmatpush2.msra.mxu0 0.0
        %1000 = vmatprep.subr.mxu0 0.0
        %1001 = vmatpush2.msra.mxu0 0.0
        %1002 = vmatprep.subr.mxu0 0.0
        %1003 = vmatpush2.msra.mxu0 0.0
        %1004 = vmatprep.subr.mxu0 0.0
        %1005 = vmatpush2.msra.mxu0 0.0
        %1006 = vmatprep.subr.mxu0 0.0
        %1007 = vmatpush2.msra.mxu0 0.0
        %1008 = vmatprep.subr.mxu0 0.0
        %1009 = vmatpush2.msra.mxu0 0.0
        %1010 = vmatprep.subr.mxu0 0.0
        %1011 = vmatpush2.msra.mxu0 0.0
        %1012 = vmatprep.subr.mxu0 0.0
        %1013 = vmatpush2.msra.mxu0 0.0
        %1014 = vmatprep.subr.mxu0 0.0
        %1015 = vmatpush2.msra.mxu0 0.0
        %1016 = vmatprep.mubr.f32.mxu0 0.0
        %1017 = vmatmul.mubr.f32.gmra.mxu0 %v934
        %v1018 = vpop.f32.mrf.mxu0
        %v1019 = vadd.f32 0.0, %v1018
        %v1020 = vpop.f32.mrf.mxu0
        %1021 = vmatprep.mubr.f32.mxu0 0.0
        %1022 = vmatmul.mubr.f32.gmra.mxu0 %v935
        %v1023 = vpop.f32.mrf.mxu0
        %v1024 = vadd.f32 0.0, %v1023
        %v1025 = vpop.f32.mrf.mxu0
        %1026 = vdwg.mxu0
        %v1027 = vadd.f32 %v932, %v1019
        %v1028 = vadd.f32 %v933, %v1024
        %v1029 = vld [vmem:[#allocation3 + $0x2] sm:$0xff]
        %v1030 = vld [vmem:[#allocation3 + $0xa] sm:$0x3]
        %v1031 = vld [vmem:[%s736] sm:$0xff]
        %v1032 = vld [vmem:[%s736 + $0x8] sm:$0xff]
        %v1033 = vld [vmem:[%s736 + $0x10] sm:$0xff]
        %v1034 = vld [vmem:[%s736 + $0x18] sm:$0xff]
        %v1035 = vld [vmem:[%s736 + $0x20] sm:$0xff]
        %v1036 = vld [vmem:[%s736 + $0x28] sm:$0xff]
        %v1037 = vld [vmem:[%s736 + $0x30] sm:$0xff]
        %v1038 = vld [vmem:[%s736 + $0x38] sm:$0xff]
        %v1039 = vld [vmem:[%s736 + $0x40] sm:$0xff]
        %v1040 = vld [vmem:[%s736 + $0x48] sm:$0xff]
        %v1041 = vld [vmem:[%s736 + $0x50] sm:$0xff]
        %v1042 = vld [vmem:[%s736 + $0x58] sm:$0xff]
        %v1043 = vld [vmem:[%s736 + $0x60] sm:$0xff]
        %v1044 = vld [vmem:[%s736 + $0x68] sm:$0xff]
        %v1045 = vld [vmem:[%s736 + $0x70] sm:$0xff]
        %v1046 = vld [vmem:[%s736 + $0x78] sm:$0xff]
        %1047 = vmatprep.subr.mxu0 0.0
        %1048 = vmatpush1.msra.mxu0 %v1046
        %1049 = vmatprep.subr.mxu0 0.0
        %1050 = vmatpush1.msra.mxu0 %v1045
        %1051 = vmatprep.subr.mxu0 0.0
        %1052 = vmatpush1.msra.mxu0 %v1044
        %1053 = vmatprep.subr.mxu0 0.0
        %1054 = vmatpush1.msra.mxu0 %v1043
        %1055 = vmatprep.subr.mxu0 0.0
        %1056 = vmatpush1.msra.mxu0 %v1042
        %1057 = vmatprep.subr.mxu0 0.0
        %1058 = vmatpush1.msra.mxu0 %v1041
        %1059 = vmatprep.subr.mxu0 0.0
        %1060 = vmatpush1.msra.mxu0 %v1040
        %1061 = vmatprep.subr.mxu0 0.0
        %1062 = vmatpush1.msra.mxu0 %v1039
        %1063 = vmatprep.subr.mxu0 0.0
        %1064 = vmatpush1.msra.mxu0 %v1038
        %1065 = vmatprep.subr.mxu0 0.0
        %1066 = vmatpush1.msra.mxu0 %v1037
        %1067 = vmatprep.subr.mxu0 0.0
        %1068 = vmatpush1.msra.mxu0 %v1036
        %1069 = vmatprep.subr.mxu0 0.0
        %1070 = vmatpush1.msra.mxu0 %v1035
        %1071 = vmatprep.subr.mxu0 0.0
        %1072 = vmatpush1.msra.mxu0 %v1034
        %1073 = vmatprep.subr.mxu0 0.0
        %1074 = vmatpush1.msra.mxu0 %v1033
        %1075 = vmatprep.subr.mxu0 0.0
        %1076 = vmatpush1.msra.mxu0 %v1032
        %1077 = vmatprep.subr.mxu0 0.0
        %1078 = vmatpush1.msra.mxu0 %v1031
        %1079 = vmatprep.subr.mxu0 0.0
        %1080 = vmatpush2.msra.mxu0 0.0
        %1081 = vmatprep.subr.mxu0 0.0
        %1082 = vmatpush2.msra.mxu0 0.0
        %1083 = vmatprep.subr.mxu0 0.0
        %1084 = vmatpush2.msra.mxu0 0.0
        %1085 = vmatprep.subr.mxu0 0.0
        %1086 = vmatpush2.msra.mxu0 0.0
        %1087 = vmatprep.subr.mxu0 0.0
        %1088 = vmatpush2.msra.mxu0 0.0
        %1089 = vmatprep.subr.mxu0 0.0
        %1090 = vmatpush2.msra.mxu0 0.0
        %1091 = vmatprep.subr.mxu0 0.0
        %1092 = vmatpush2.msra.mxu0 0.0
        %1093 = vmatprep.subr.mxu0 0.0
        %1094 = vmatpush2.msra.mxu0 0.0
        %1095 = vmatprep.subr.mxu0 0.0
        %1096 = vmatpush2.msra.mxu0 0.0
        %1097 = vmatprep.subr.mxu0 0.0
        %1098 = vmatpush2.msra.mxu0 0.0
        %1099 = vmatprep.subr.mxu0 0.0
        %1100 = vmatpush2.msra.mxu0 0.0
        %1101 = vmatprep.subr.mxu0 0.0
        %1102 = vmatpush2.msra.mxu0 0.0
        %1103 = vmatprep.subr.mxu0 0.0
        %1104 = vmatpush2.msra.mxu0 0.0
        %1105 = vmatprep.subr.mxu0 0.0
        %1106 = vmatpush2.msra.mxu0 0.0
        %1107 = vmatprep.subr.mxu0 0.0
        %1108 = vmatpush2.msra.mxu0 0.0
        %1109 = vmatprep.subr.mxu0 0.0
        %1110 = vmatpush2.msra.mxu0 0.0
        %1111 = vmatprep.mubr.f32.mxu0 0.0
        %1112 = vmatmul.mubr.f32.gmra.mxu0 %v1029
        %v1113 = vpop.f32.mrf.mxu0
        %v1114 = vadd.f32 0.0, %v1113
        %v1115 = vpop.f32.mrf.mxu0
        %1116 = vmatprep.mubr.f32.mxu0 0.0
        %1117 = vmatmul.mubr.f32.gmra.mxu0 %v1030
        %v1118 = vpop.f32.mrf.mxu0
        %v1119 = vadd.f32 0.0, %v1118
        %v1120 = vpop.f32.mrf.mxu0
        %1121 = vdwg.mxu0
        %v1122 = vadd.f32 %v1027, %v1114
        %v1123 = vadd.f32 %v1028, %v1119
        %1124 = vst [vmem:[%s239] sm:$0xff] %v1122
        %1125 = vst [vmem:[%s239 + $0x8] sm:$0x3] %v1123
        %p1126 = scmp.lt.s32.totalorder %s17, 1
        %s1127 = scalar_select %p1126, %s17, 1
        %s1128 = smul.addr %s1127, 2
        %s1129 = smul.addr %s1128, 8
        %s1130 = scalar_lea.vmem %s5, %s1129
        // Predicated region
        $region45: #{forward.1} parent=39 // pred_check
          %p1131 = pneg %p145
        $region46: #{forward.1} parent=39 // pred_check_branch
          %1133 = sbr.rel (%p1131) target = $region48
        $region47: #{forward.1} parent=39 // pred_region
          _
        $region48: #{forward.1} parent=39 // pred_fallthru
          _
      $region40: #{forward.1} parent=5 // pred_fallthru
        _
      %p1134 = scmp.le.s32.totalorder 2, %s12
      // Predicated region
      $region49: #{forward.1} parent=5 // pred_check
        %p1135 = pneg %p1134
      $region50: #{forward.1} parent=5 // pred_check_branch
        %1137 = sbr.rel (%p1135) target = $region52
      $region51: #{forward.1} parent=5 // pred_region
        %s1138 = ssub.s32 %s12, 2
        // Predicated region
        $region53: #{forward.1} parent=51 // pred_check
          %p1139 = pneg %p151
        $region54: #{forward.1} parent=51 // pred_check_branch
          %1141 = sbr.rel (%p1139) target = $region56
        $region55: #{forward.1} parent=51 // pred_region
          %p1142 = scmp.lt.s32.totalorder %s18, 1
          %s1143 = scalar_select %p1142, %s18, 1
          %s1144 = smul.addr %s1143, 2
          %s1145 = smul.addr %s1144, 8
          %s1146 = scalar_lea.vmem %s5, %s1145
        $region56: #{forward.1} parent=51 // pred_fallthru
          _
      $region52: #{forward.1} parent=5 // pred_fallthru
        _
    $region6: #{forward.1} parent=1 // loop_footer
      %s16 = sadd.s32 1, %s12
    $region7: #{forward.1} parent=1 // loop_footer_branch
      %11 = sbr.rel target = $region3
    $region8: #{forward.1} parent=1 // loop_exit
      _
    %1147 = vsyncpa [#allocation5], 1
    %s1148 = scalar_lea.sflag [#allocation5], 1
    %1149 = vsyncpa %s1148, 1

</llo_original>
